<compile_context>
chip_gen: v7x
topology: tpu7x:2x2x1
jax: 0.10.0
libtpu: 0.0.40
codegen_flags: <defaults>
</compile_context>

<pallas_src>
import functools

import jax
import jax.numpy as jnp
import numpy as np
from jax.experimental import pallas as pl
from jax.experimental.pallas import tpu as pltpu

M_YEARS = 5
FEAT_IN = 3 * M_YEARS        # 15
FEAT = FEAT_IN + 1           # 16: features + ones column (bias folded)
EMB = 12
TILE_A_MAX = 4096            # athlete-axis tile (multiple of 128) for big `a`

# ----- static row offsets inside the packed parameter slab -------------------
_OFF_W_CA  = 0     # (16, 12): rows 0..14 = [Wc^T | Wa^T], row 15 = [bc | ba]
_OFF_W_H   = 16    # (12, 12)
_OFF_W_QKV = 32    # (12, 36): [Wq^T/sqrt(E) | Wk^T | Wv^T @ Wo^T]
_OFF_W_1   = 48    # (12, 24)
_OFF_W_2   = 64    # (24, 12)
_OFF_W_F   = 88    # (12, 3)
_OFF_B_H   = 104   # (1, 12)
_OFF_B_QKV = 105   # (1, 36): [bq/sqrt(E) | bk | bv @ Wo^T + bo]
_OFF_B_1   = 106   # (1, 24)
_OFF_B_2   = 107   # (1, 12)
_OFF_B_F   = 108   # (1, 3)
_SLAB_ROWS = 128
_SLAB_COLS = 128


def _round_up(x, m):
    return ((x + m - 1) // m) * m


def medal_kernel(c,                           # static python int (closure)
                 host_idx_ref,                # SMEM (1,) int32 (scalar prefetch)
                 country_ref,                 # VMEM (c_pad, 16) f32 (resident)
                 athlete_ref,                 # VMEM (tile_a, 16) f32 (streamed)
                 a2c_ref,                     # VMEM (c, tile_a) bf16 (streamed)
                 w_ref,                       # VMEM (128, 128) packed params
                 out_ref,                     # VMEM (c, 3) f32
                 acc_ref):                    # VMEM (c, 12) f32 accumulator
    f32 = jnp.float32
    step = pl.program_id(0)
    last = pl.num_programs(0) - 1
    W = w_ref
    w_ca = W[_OFF_W_CA:_OFF_W_CA + FEAT, 0:12]          # (16, 12), bias in row 15

    @pl.when(step == 0)
    def _():
        acc_ref[...] = jnp.zeros_like(acc_ref)

    # ---- per-tile: linear_A on athlete rows, aggregate into countries -------
    # a2c is a 0/1 membership matrix (exact in bf16); upcast on-chip, f32 acc.
    ath_out = jnp.dot(athlete_ref[...], w_ca, preferred_element_type=f32)
    acc_ref[...] += jnp.dot(a2c_ref[...].astype(f32), ath_out,
                            preferred_element_type=f32)
    # TODO(synk): for very large `a`, a scalar-prefetched segment-sum over the
    # athlete->country index vector would remove the O(c*a) a2c traffic.

    # ---- epilogue: rest of the network on the (c, 12) country embedding -----
    @pl.when(step == last)
    def _():
        # linear_C on the resident country block (cols 0:6 valid).
        country_out = jnp.dot(country_ref[...], w_ca, preferred_element_type=f32)
        country_part = country_out[0:c, :]

        # lane-mask select replaces the lane-axis concatenate (pure VPU).
        col_ids = jax.lax.broadcasted_iota(jnp.int32, (c, EMB), 1)
        combined = jnp.where(col_ids < 6, country_part, acc_ref[...])

        # host effect: only row host_idx; gate mirrors PyTorch truthiness
        # (`if host_country_index:` -> index 0 gets no host effect).
        w_h = W[_OFF_W_H:_OFF_W_H + 12, 0:12]
        b_h = W[_OFF_B_H:_OFF_B_H + 1, 0:12]
        host_idx = host_idx_ref[0]
        host_all = jnp.dot(combined, w_h, preferred_element_type=f32) + b_h
        row_ids = jax.lax.broadcasted_iota(jnp.int32, (c, EMB), 0)
        mask = (row_ids == host_idx) & (host_idx != 0)
        combined = jnp.where(mask, host_all, combined)
        # TODO(synk): for large c, compute the host row alone (dynamic 1-row
        # slice) instead of a c-row matmul that is then 1-row masked.

        # leaky_relu(negative_slope=0.1)
        act = jnp.where(combined > 0, combined, 0.1 * combined)        # (c, 12)

        # MultiheadAttention (1 head); 1/sqrt(E) folded into Wq/bq and the
        # out-projection (Wo, bo) folded into the V columns / bias at pack time.
        w_qkv = W[_OFF_W_QKV:_OFF_W_QKV + 12, 0:36]
        b_qkv = W[_OFF_B_QKV:_OFF_B_QKV + 1, 0:36]
        qkv = jnp.dot(act, w_qkv, preferred_element_type=f32) + b_qkv  # (c, 36)
        q = qkv[:, 0:12]
        k = qkv[:, 12:24]
        v = qkv[:, 24:36]
        scores = jax.lax.dot_general(q, k, (((1,), (1,)), ((), ())),
                                     preferred_element_type=f32)       # (c, c)
        scores = scores - jnp.max(scores, axis=-1, keepdims=True)
        e = jnp.exp(scores)
        denom = jnp.sum(e, axis=-1, keepdims=True)
        r = pl.reciprocal(denom, approx=True)        # EUP slot
        r = r * (2.0 - denom * r)                    # one Newton step (VPU, cheap)
        p_attn = e * r
        attn = jnp.dot(p_attn, v, preferred_element_type=f32)          # (c, 12)
        attn = attn + act                                              # residual 1

        # FFN: Linear(12,24) -> ReLU -> Linear(24,12)
        w1 = W[_OFF_W_1:_OFF_W_1 + 12, 0:24]
        b1 = W[_OFF_B_1:_OFF_B_1 + 1, 0:24]
        w2 = W[_OFF_W_2:_OFF_W_2 + 24, 0:12]
        b2 = W[_OFF_B_2:_OFF_B_2 + 1, 0:12]
        h = jnp.maximum(jnp.dot(attn, w1, preferred_element_type=f32) + b1, 0.0)
        ffn = jnp.dot(h, w2, preferred_element_type=f32) + b2
        total = ffn + attn                                             # residual 2

        # dropout(p=0.1) is identity in inference mode.
        # TODO(synk): training-mode dropout (stateful PRNG) not implemented.
        w_f = W[_OFF_W_F:_OFF_W_F + 12, 0:3]
        b_f = W[_OFF_B_F:_OFF_B_F + 1, 0:3]
        out_ref[...] = jnp.dot(total, w_f, preferred_element_type=f32) + b_f


def init_params(key):
    """Deterministic parameter init matching the nn.Module layer shapes."""
    def dense(key, out_f, in_f):
        k1, k2 = jax.random.split(key)
        lim = 1.0 / np.sqrt(in_f)
        w = jax.random.uniform(k1, (out_f, in_f), jnp.float32, -lim, lim)
        b = jax.random.uniform(k2, (1, out_f), jnp.float32, -lim, lim)
        return w, b

    keys = jax.random.split(key, 10)
    p = {}
    p["wc"], p["bc"] = dense(keys[0], 6, FEAT_IN)        # linear_C
    p["wa"], p["ba"] = dense(keys[1], 6, FEAT_IN)        # linear_A
    p["wh"], p["bh"] = dense(keys[2], EMB, EMB)          # host_effect
    p["wq"], p["bq"] = dense(keys[3], EMB, EMB)          # attn in-proj q
    p["wk"], p["bk"] = dense(keys[4], EMB, EMB)          # attn in-proj k
    p["wv"], p["bv"] = dense(keys[5], EMB, EMB)          # attn in-proj v
    p["wo"], p["bo"] = dense(keys[6], EMB, EMB)          # attn out-proj
    p["w1"], p["b1"] = dense(keys[7], 24, EMB)           # ffn[0]
    p["w2"], p["b2"] = dense(keys[8], EMB, 24)           # ffn[2]
    p["wf"], p["bf"] = dense(keys[9], 3, EMB)            # linear_final
    return p


def pack_params(params):
    """Pack all weights/biases into one (128,128) f32 slab.

    Weights are pre-transposed to (in, out); 1/sqrt(EMB) is folded into Wq/bq;
    the attention out-projection (Wo, bo) is folded into the V block; linear_C
    & linear_A are column-concatenated with their biases folded into row 15.
    """
    p = params
    scale = np.float32(1.0 / np.sqrt(EMB))
    slab = jnp.zeros((_SLAB_ROWS, _SLAB_COLS), jnp.float32)

    def put(s, row, arr):
        arr = jnp.asarray(arr, jnp.float32)
        return s.at[row:row + arr.shape[0], 0:arr.shape[1]].set(arr)

    w_ca = jnp.concatenate([p["wc"].T, p["wa"].T], axis=1)          # (15, 12)
    b_ca = jnp.concatenate([p["bc"], p["ba"]], axis=1)              # (1, 12)
    slab = put(slab, _OFF_W_CA, jnp.concatenate([w_ca, b_ca], axis=0))

    slab = put(slab, _OFF_W_H, p["wh"].T)
    wv_o = p["wv"].T @ p["wo"].T                                    # Wo fold
    bv_o = p["bv"] @ p["wo"].T + p["bo"]
    slab = put(slab, _OFF_W_QKV,
               jnp.concatenate([p["wq"].T * scale, p["wk"].T, wv_o], axis=1))
    slab = put(slab, _OFF_B_QKV,
               jnp.concatenate([p["bq"] * scale, p["bk"], bv_o], axis=1))
    slab = put(slab, _OFF_W_1, p["w1"].T)
    slab = put(slab, _OFF_W_2, p["w2"].T)
    slab = put(slab, _OFF_W_F, p["wf"].T)
    slab = put(slab, _OFF_B_H, p["bh"])
    slab = put(slab, _OFF_B_1, p["b1"])
    slab = put(slab, _OFF_B_2, p["b2"])
    slab = put(slab, _OFF_B_F, p["bf"])
    return slab


@jax.jit
def medal_forward(country_data, athlete_data, athlete_to_country,
                  host_country_index, w_slab):
    f32 = jnp.float32
    c = country_data.shape[0]
    a = athlete_data.shape[0]
    c_pad = _round_up(c, 8)
    tile_a = _round_up(a, 8) if a <= TILE_A_MAX else TILE_A_MAX
    a_pad = _round_up(a, tile_a)
    n_steps = a_pad // tile_a

    # features + ones column (bias folded into the first matmul); rows padded
    # to sublane-aligned counts (padding rows are all-zero).
    country_x = jnp.concatenate(
        [country_data.reshape(c, -1).astype(f32), jnp.ones((c, 1), f32)], axis=1)
    country_x = jnp.pad(country_x, ((0, c_pad - c), (0, 0)))
    athlete_x = jnp.concatenate(
        [athlete_data.reshape(a, -1).astype(f32), jnp.ones((a, 1), f32)], axis=1)
    athlete_x = jnp.pad(athlete_x, ((0, a_pad - a), (0, 0)))

    # 0/1 membership matrix: bf16 is exact and halves the HBM/VMEM bytes of the
    # only O(c*a) operand.  (int8 would also work on v5e/v6e, not v7x.)
    a2c = jnp.pad(athlete_to_country.astype(jnp.bfloat16),
                  ((0, 0), (0, a_pad - a)))

    host_idx = jnp.asarray(host_country_index, jnp.int32).reshape(1)

    flops = (2 * (c_pad + a_pad) * FEAT * EMB + 2 * c * a_pad * EMB
             + 2 * c * EMB * 36 + 4 * c * c * EMB
             + 2 * c * (EMB * 24 + 24 * EMB + EMB * 3))
    bytes_accessed = (4 * c_pad * FEAT + 4 * a_pad * FEAT + 2 * c * a_pad
                      + 4 * _SLAB_ROWS * _SLAB_COLS + 4 * c * 3)

    kernel = functools.partial(medal_kernel, c)
    # TODO(synk): when batching many scenarios, add a leading "parallel" grid
    # axis (megacore on v7x) with the slab index_map pinned to (0, 0).
    return pl.pallas_call(
        kernel,
        out_shape=jax.ShapeDtypeStruct((c, 3), f32),
        grid_spec=pltpu.PrefetchScalarGridSpec(
            num_scalar_prefetch=1,
            grid=(n_steps,),
            in_specs=[
                pl.BlockSpec((c_pad, FEAT), lambda i, h: (0, 0)),       # resident
                pl.BlockSpec((tile_a, FEAT), lambda i, h: (i, 0)),      # streamed
                pl.BlockSpec((c, tile_a), lambda i, h: (0, i)),         # streamed
                pl.BlockSpec((_SLAB_ROWS, _SLAB_COLS), lambda i, h: (0, 0)),
            ],
            out_specs=pl.BlockSpec((c, 3), lambda i, h: (0, 0)),
            scratch_shapes=[pltpu.VMEM((c, EMB), f32)],
        ),
        compiler_params=pltpu.CompilerParams(
            dimension_semantics=("arbitrary",)),       # athlete axis = reduction
        cost_estimate=pl.CostEstimate(flops=flops, transcendentals=c * c,
                                      bytes_accessed=bytes_accessed),
    )(host_idx, country_x, athlete_x, a2c, w_slab)


def medal_forward_ref(country_data, athlete_data, athlete_to_country,
                      host_country_index, params):
    """Pure-JAX reference mirroring the PyTorch forward (eval mode)."""
    p = params
    c = country_data.shape[0]
    a = athlete_data.shape[0]
    cd = country_data.reshape(c, -1) @ p["wc"].T + p["bc"]
    ad = athlete_data.reshape(a, -1) @ p["wa"].T + p["ba"]
    contrib = athlete_to_country.astype(jnp.float32) @ ad
    combined = jnp.concatenate([cd, contrib], axis=1)
    if host_country_index:
        host_row = combined[host_country_index] @ p["wh"].T + p["bh"][0]
        combined = combined.at[host_country_index].set(host_row)
    act = jnp.where(combined > 0, combined, 0.1 * combined)
    q = act @ p["wq"].T + p["bq"]
    k = act @ p["wk"].T + p["bk"]
    v = act @ p["wv"].T + p["bv"]
    s = (q / jnp.sqrt(jnp.float32(EMB))) @ k.T
    pr = jax.nn.softmax(s, axis=-1)
    attn = (pr @ v) @ p["wo"].T + p["bo"]
    attn = attn + act
    h = jnp.maximum(attn @ p["w1"].T + p["b1"], 0.0)
    ffn = h @ p["w2"].T + p["b2"]
    total = ffn + attn
    return total @ p["wf"].T + p["bf"]


if __name__ == "__main__":
    key = jax.random.PRNGKey(0)
    k_params, k_c, k_a, k_map = jax.random.split(key, 4)

    C, A = 8, 16                              # countries, athletes
    country_data = jax.random.normal(k_c, (C, M_YEARS, 3), jnp.float32)
    athlete_data = jax.random.normal(k_a, (A, M_YEARS, 3), jnp.float32)
    # deterministic athlete -> country assignment (binary membership matrix)
    assign = jnp.arange(A) % C
    athlete_to_country = jax.nn.one_hot(assign, C, dtype=jnp.float32).T  # (C, A)
    host_country_index = 3

    params = init_params(k_params)
    w_slab = jax.block_until_ready(pack_params(params))   # packed once

    out = medal_forward(country_data, athlete_data, athlete_to_country,
                        host_country_index, w_slab)
    out = jax.block_until_ready(out)

    ref = medal_forward_ref(country_data, athlete_data, athlete_to_country,
                            host_country_index, params)
    assert out.shape == (C, 3)
    assert np.allclose(np.asarray(out), np.asarray(ref), atol=1e-4, rtol=1e-4)
    print("KERNEL_OK")
</pallas_src>

<mosaic_0001>
module attributes {stable_mosaic.version = 11 : i64} {
  func.func @medal_kernel(%arg0: i32, %arg1: memref<1xi32, #tpu.memory_space<smem>>, %arg2: memref<8x16xf32, #tpu.memory_space<vmem>>, %arg3: memref<16x16xf32, #tpu.memory_space<vmem>>, %arg4: memref<8x16xbf16, #tpu.memory_space<vmem>>, %arg5: memref<128x128xf32, #tpu.memory_space<vmem>>, %arg6: memref<8x3xf32, #tpu.memory_space<vmem>>, %arg7: memref<8x12xf32, #tpu.memory_space<vmem>>) attributes {dimension_semantics = [#tpu.dimension_semantics<arbitrary>], iteration_bounds = array<i64: 1>, scalar_prefetch = 1 : i64, scratch_operands = 1 : i64, tpu.core_type = #tpu.core_type<tc>, window_params = [{pipeline_mode = #tpu.pipeline_mode<synchronous>, transform_indices = @transform_0, window_bounds = array<i64: 8, 16>}, {transform_indices = @transform_1, window_bounds = array<i64: 16, 16>}, {transform_indices = @transform_2, window_bounds = array<i64: 8, 16>}, {pipeline_mode = #tpu.pipeline_mode<synchronous>, transform_indices = @transform_3, window_bounds = array<i64: 128, 128>}, {pipeline_mode = #tpu.pipeline_mode<synchronous>, transform_indices = @transform_4, window_bounds = array<i64: 8, 3>}]} {
    %c0 = arith.constant 0 : index
    %c0_0 = arith.constant 0 : index
    %0 = vector.load %arg5[%c0, %c0_0] : memref<128x128xf32, #tpu.memory_space<vmem>>, vector<16x12xf32>
    %c0_i32 = arith.constant 0 : i32
    %1 = arith.cmpi eq, %arg0, %c0_i32 : i32
    %2 = arith.extui %1 : i1 to i32
    %c0_i32_1 = arith.constant 0 : i32
    %3 = arith.cmpi ne, %2, %c0_i32_1 : i32
    scf.if %3 {
      %cst_13 = arith.constant 0.000000e+00 : f32
      %15 = vector.broadcast %cst_13 : f32 to vector<8x12xf32>
      %c0_14 = arith.constant 0 : index
      %c0_15 = arith.constant 0 : index
      %16 = vector.load %arg7[%c0_14, %c0_15] : memref<8x12xf32, #tpu.memory_space<vmem>>, vector<8x12xf32>
      tpu.vector_store %arg7[%c0_14, %c0_15], %15 {strides = array<i32>} : memref<8x12xf32, #tpu.memory_space<vmem>>, vector<8x12xf32>,
    } else {
    }
    %c0_2 = arith.constant 0 : index
    %c0_3 = arith.constant 0 : index
    %4 = vector.load %arg3[%c0_2, %c0_3] : memref<16x16xf32, #tpu.memory_space<vmem>>, vector<16x16xf32>
    %cst = arith.constant dense<0.000000e+00> : vector<16x12xf32>
    %5 = tpu.matmul %4, %0, %cst {dimension_numbers = #tpu.dot_dimension_numbers<[1], [0], [0], [1], [0, 0, 1, 1], [], []>} : vector<16x16xf32>, vector<16x12xf32>, vector<16x12xf32> -> vector<16x12xf32>
    %c0_4 = arith.constant 0 : index
    %c0_5 = arith.constant 0 : index
    %6 = vector.load %arg7[%c0_4, %c0_5] : memref<8x12xf32, #tpu.memory_space<vmem>>, vector<8x12xf32>
    %c0_6 = arith.constant 0 : index
    %c0_7 = arith.constant 0 : index
    %7 = vector.load %arg4[%c0_6, %c0_7] : memref<8x16xbf16, #tpu.memory_space<vmem>>, vector<8x16xbf16>
    %8 = arith.extf %7 : vector<8x16xbf16> to vector<8x16xf32>
    %cst_8 = arith.constant dense<0.000000e+00> : vector<8x12xf32>
    %9 = tpu.matmul %8, %5, %cst_8 {dimension_numbers = #tpu.dot_dimension_numbers<[1], [0], [0], [1], [0, 0, 1, 1], [], []>} : vector<8x16xf32>, vector<16x12xf32>, vector<8x12xf32> -> vector<8x12xf32>
    %10 = arith.addf %6, %9 : vector<8x12xf32>
    %c0_9 = arith.constant 0 : index
    %c0_10 = arith.constant 0 : index
    %11 = vector.load %arg7[%c0_9, %c0_10] : memref<8x12xf32, #tpu.memory_space<vmem>>, vector<8x12xf32>
    tpu.vector_store %arg7[%c0_9, %c0_10], %10 {strides = array<i32>} : memref<8x12xf32, #tpu.memory_space<vmem>>, vector<8x12xf32>,
    %c0_i32_11 = arith.constant 0 : i32
    %12 = arith.cmpi eq, %arg0, %c0_i32_11 : i32
    %13 = arith.extui %12 : i1 to i32
    %c0_i32_12 = arith.constant 0 : i32
    %14 = arith.cmpi ne, %13, %c0_i32_12 : i32
    scf.if %14 {
      %c0_13 = arith.constant 0 : index
      %c0_14 = arith.constant 0 : index
      %15 = vector.load %arg2[%c0_13, %c0_14] : memref<8x16xf32, #tpu.memory_space<vmem>>, vector<8x16xf32>
      %cst_15 = arith.constant dense<0.000000e+00> : vector<8x12xf32>
      %16 = tpu.matmul %15, %0, %cst_15 {dimension_numbers = #tpu.dot_dimension_numbers<[1], [0], [0], [1], [0, 0, 1, 1], [], []>} : vector<8x16xf32>, vector<16x12xf32>, vector<8x12xf32> -> vector<8x12xf32>
      %17 = tpu.iota {dimensions = array<i32: 1>} : vector<8x12xi32>
      %c6_i32 = arith.constant 6 : i32
      %18 = vector.broadcast %c6_i32 : i32 to vector<8x12xi32>
      %19 = arith.cmpi slt, %17, %18 : vector<8x12xi32>
      %c0_16 = arith.constant 0 : index
      %c0_17 = arith.constant 0 : index
      %20 = vector.load %arg7[%c0_16, %c0_17] : memref<8x12xf32, #tpu.memory_space<vmem>>, vector<8x12xf32>
      %21 = arith.select %19, %16, %20 : vector<8x12xi1>, vector<8x12xf32>
      %c16 = arith.constant 16 : index
      %c0_18 = arith.constant 0 : index
      %22 = vector.load %arg5[%c16, %c0_18] : memref<128x128xf32, #tpu.memory_space<vmem>>, vector<12x12xf32>
      %c104 = arith.constant 104 : index
      %c0_19 = arith.constant 0 : index
      %23 = vector.load %arg5[%c104, %c0_19] : memref<128x128xf32, #tpu.memory_space<vmem>>, vector<1x12xf32>
      %c0_20 = arith.constant 0 : index
      %24 = memref.load %arg1[%c0_20] : memref<1xi32, #tpu.memory_space<smem>>
      %cst_21 = arith.constant dense<0.000000e+00> : vector<8x12xf32>
      %25 = tpu.matmul %21, %22, %cst_21 {dimension_numbers = #tpu.dot_dimension_numbers<[1], [0], [0], [1], [0, 0, 1, 1], [], []>} : vector<8x12xf32>, vector<12x12xf32>, vector<8x12xf32> -> vector<8x12xf32>
      %26 = vector.broadcast %23 : vector<1x12xf32> to vector<8x12xf32>
      %27 = arith.addf %25, %26 : vector<8x12xf32>
      %28 = tpu.iota {dimensions = array<i32: 0>} : vector<8x12xi32>
      %29 = vector.broadcast %24 : i32 to vector<8x12xi32>
      %30 = arith.cmpi eq, %28, %29 : vector<8x12xi32>
      %c0_i32_22 = arith.constant 0 : i32
      %31 = arith.cmpi ne, %24, %c0_i32_22 : i32
      %32 = vector.broadcast %31 : i1 to vector<8x12xi1>
      %33 = arith.andi %30, %32 : vector<8x12xi1>
      %34 = arith.select %33, %27, %21 : vector<8x12xi1>, vector<8x12xf32>
      %cst_23 = arith.constant 0.000000e+00 : f32
      %35 = vector.broadcast %cst_23 : f32 to vector<8x12xf32>
      %36 = arith.cmpf ogt, %34, %35 : vector<8x12xf32>
      %cst_24 = arith.constant 1.000000e-01 : f32
      %37 = vector.broadcast %cst_24 : f32 to vector<8x12xf32>
      %38 = arith.mulf %37, %34 : vector<8x12xf32>
      %39 = arith.select %36, %34, %38 : vector<8x12xi1>, vector<8x12xf32>
      %c32 = arith.constant 32 : index
      %c0_25 = arith.constant 0 : index
      %40 = vector.load %arg5[%c32, %c0_25] : memref<128x128xf32, #tpu.memory_space<vmem>>, vector<12x36xf32>
      %c105 = arith.constant 105 : index
      %c0_26 = arith.constant 0 : index
      %41 = vector.load %arg5[%c105, %c0_26] : memref<128x128xf32, #tpu.memory_space<vmem>>, vector<1x36xf32>
      %cst_27 = arith.constant dense<0.000000e+00> : vector<8x36xf32>
      %42 = tpu.matmul %39, %40, %cst_27 {dimension_numbers = #tpu.dot_dimension_numbers<[1], [0], [0], [1], [0, 0, 1, 1], [], []>} : vector<8x12xf32>, vector<12x36xf32>, vector<8x36xf32> -> vector<8x36xf32>
      %43 = vector.broadcast %41 : vector<1x36xf32> to vector<8x36xf32>
      %44 = arith.addf %42, %43 : vector<8x36xf32>
      %45 = vector.extract_strided_slice %44 {offsets = [0, 0], sizes = [8, 12], strides = [1, 1]} : vector<8x36xf32> to vector<8x12xf32>
      %46 = vector.extract_strided_slice %44 {offsets = [0, 12], sizes = [8, 12], strides = [1, 1]} : vector<8x36xf32> to vector<8x12xf32>
      %47 = vector.extract_strided_slice %44 {offsets = [0, 24], sizes = [8, 12], strides = [1, 1]} : vector<8x36xf32> to vector<8x12xf32>
      %cst_28 = arith.constant dense<0.000000e+00> : vector<8x8xf32>
      %48 = tpu.matmul %45, %46, %cst_28 {dimension_numbers = #tpu.dot_dimension_numbers<[1], [1], [0], [0], [0, 0, 1, 0], [], []>} : vector<8x12xf32>, vector<8x12xf32>, vector<8x8xf32> -> vector<8x8xf32>
      %cst_29 = arith.constant dense<0xFF800000> : vector<8xf32>
      %49 = vector.multi_reduction <maximumf>, %48, %cst_29 [1] : vector<8x8xf32> to vector<8xf32>
      %50 = vector.shape_cast %49 : vector<8xf32> to vector<8x1xf32>
      %51 = vector.broadcast %50 : vector<8x1xf32> to vector<8x8xf32>
      %52 = arith.subf %48, %51 : vector<8x8xf32>
      %53 = math.exp %52 : vector<8x8xf32>
      %cst_30 = arith.constant dense<0.000000e+00> : vector<8xf32>
      %54 = vector.multi_reduction <add>, %53, %cst_30 [1] : vector<8x8xf32> to vector<8xf32>
      %55 = vector.shape_cast %54 : vector<8xf32> to vector<8x1xf32>
      %56 = tpu.reciprocal %55 {approx = true} : vector<8x1xf32> -> vector<8x1xf32>
      %57 = arith.mulf %55, %56 : vector<8x1xf32>
      %cst_31 = arith.constant 2.000000e+00 : f32
      %58 = vector.broadcast %cst_31 : f32 to vector<8x1xf32>
      %59 = arith.subf %58, %57 : vector<8x1xf32>
      %60 = arith.mulf %56, %59 : vector<8x1xf32>
      %61 = vector.broadcast %60 : vector<8x1xf32> to vector<8x8xf32>
      %62 = arith.mulf %53, %61 : vector<8x8xf32>
      %cst_32 = arith.constant dense<0.000000e+00> : vector<8x12xf32>
      %63 = tpu.matmul %62, %47, %cst_32 {dimension_numbers = #tpu.dot_dimension_numbers<[1], [0], [0], [1], [0, 0, 1, 1], [], []>} : vector<8x8xf32>, vector<8x12xf32>, vector<8x12xf32> -> vector<8x12xf32>
      %64 = arith.addf %63, %39 : vector<8x12xf32>
      %c48 = arith.constant 48 : index
      %c0_33 = arith.constant 0 : index
      %65 = vector.load %arg5[%c48, %c0_33] : memref<128x128xf32, #tpu.memory_space<vmem>>, vector<12x24xf32>
      %c106 = arith.constant 106 : index
      %c0_34 = arith.constant 0 : index
      %66 = vector.load %arg5[%c106, %c0_34] : memref<128x128xf32, #tpu.memory_space<vmem>>, vector<1x24xf32>
      %c64 = arith.constant 64 : index
      %c0_35 = arith.constant 0 : index
      %67 = vector.load %arg5[%c64, %c0_35] : memref<128x128xf32, #tpu.memory_space<vmem>>, vector<24x12xf32>
      %c107 = arith.constant 107 : index
      %c0_36 = arith.constant 0 : index
      %68 = vector.load %arg5[%c107, %c0_36] : memref<128x128xf32, #tpu.memory_space<vmem>>, vector<1x12xf32>
      %cst_37 = arith.constant dense<0.000000e+00> : vector<8x24xf32>
      %69 = tpu.matmul %64, %65, %cst_37 {dimension_numbers = #tpu.dot_dimension_numbers<[1], [0], [0], [1], [0, 0, 1, 1], [], []>} : vector<8x12xf32>, vector<12x24xf32>, vector<8x24xf32> -> vector<8x24xf32>
      %70 = vector.broadcast %66 : vector<1x24xf32> to vector<8x24xf32>
      %71 = arith.addf %69, %70 : vector<8x24xf32>
      %cst_38 = arith.constant 0.000000e+00 : f32
      %72 = vector.broadcast %cst_38 : f32 to vector<8x24xf32>
      %73 = arith.maximumf %71, %72 : vector<8x24xf32>
      %cst_39 = arith.constant dense<0.000000e+00> : vector<8x12xf32>
      %74 = tpu.matmul %73, %67, %cst_39 {dimension_numbers = #tpu.dot_dimension_numbers<[1], [0], [0], [1], [0, 0, 1, 1], [], []>} : vector<8x24xf32>, vector<24x12xf32>, vector<8x12xf32> -> vector<8x12xf32>
      %75 = vector.broadcast %68 : vector<1x12xf32> to vector<8x12xf32>
      %76 = arith.addf %74, %75 : vector<8x12xf32>
      %77 = arith.addf %76, %64 : vector<8x12xf32>
      %c88 = arith.constant 88 : index
      %c0_40 = arith.constant 0 : index
      %78 = vector.load %arg5[%c88, %c0_40] : memref<128x128xf32, #tpu.memory_space<vmem>>, vector<12x3xf32>
      %c108 = arith.constant 108 : index
      %c0_41 = arith.constant 0 : index
      %79 = vector.load %arg5[%c108, %c0_41] : memref<128x128xf32, #tpu.memory_space<vmem>>, vector<1x3xf32>
      %cst_42 = arith.constant dense<0.000000e+00> : vector<8x3xf32>
      %80 = tpu.matmul %77, %78, %cst_42 {dimension_numbers = #tpu.dot_dimension_numbers<[1], [0], [0], [1], [0, 0, 1, 1], [], []>} : vector<8x12xf32>, vector<12x3xf32>, vector<8x3xf32> -> vector<8x3xf32>
      %81 = vector.broadcast %79 : vector<1x3xf32> to vector<8x3xf32>
      %82 = arith.addf %80, %81 : vector<8x3xf32>
      %c0_43 = arith.constant 0 : index
      %c0_44 = arith.constant 0 : index
      %83 = vector.load %arg6[%c0_43, %c0_44] : memref<8x3xf32, #tpu.memory_space<vmem>>, vector<8x3xf32>
      tpu.vector_store %arg6[%c0_43, %c0_44], %82 {strides = array<i32>} : memref<8x3xf32, #tpu.memory_space<vmem>>, vector<8x3xf32>,
    } else {
    }
    return
  }
  func.func @transform_0(%arg0: i32, %arg1: memref<1xi32, #tpu.memory_space<smem>>) -> (i32, i32) {
    %c0_i32 = arith.constant 0 : i32
    %c0_i32_0 = arith.constant 0 : i32
    %c0_i32_1 = arith.constant 0 : i32
    return %c0_i32, %c0_i32_0 : i32, i32
  }
  func.func @transform_1(%arg0: i32, %arg1: memref<1xi32, #tpu.memory_space<smem>>) -> (i32, i32) {
    %c0_i32 = arith.constant 0 : i32
    %c0_i32_0 = arith.constant 0 : i32
    return %arg0, %c0_i32 : i32, i32
  }
  func.func @transform_2(%arg0: i32, %arg1: memref<1xi32, #tpu.memory_space<smem>>) -> (i32, i32) {
    %c0_i32 = arith.constant 0 : i32
    %c0_i32_0 = arith.constant 0 : i32
    return %c0_i32, %arg0 : i32, i32
  }
  func.func @transform_3(%arg0: i32, %arg1: memref<1xi32, #tpu.memory_space<smem>>) -> (i32, i32) {
    %c0_i32 = arith.constant 0 : i32
    %c0_i32_0 = arith.constant 0 : i32
    %c0_i32_1 = arith.constant 0 : i32
    return %c0_i32, %c0_i32_0 : i32, i32
  }
  func.func @transform_4(%arg0: i32, %arg1: memref<1xi32, #tpu.memory_space<smem>>) -> (i32, i32) {
    %c0_i32 = arith.constant 0 : i32
    %c0_i32_0 = arith.constant 0 : i32
    %c0_i32_1 = arith.constant 0 : i32
    return %c0_i32, %c0_i32_0 : i32, i32
  }
}

</mosaic_0001>

<llo_original>
// kernel: medal_forward.1
$region0: #{medal_forward.1}
  #allocation0 [shape = 'u32[]', space=smem, size = 0x4, offset = 0x4, fixed_abs, tag = 'smem constant byte address 0x4 - core index']
  #allocation1 [shape = 'u32[144,128]{1,0:T(1,128)}', space=vmem, size = 0x12000, scoped, tag = 'internal scratch']
  #allocation2 [shape = 'f32[8,12]{1,0:T(8,128)}', space=vmem, size = 0x1000, scoped, tag = 'scratch operand']
  #allocation3 [shape = 's32[1]{0}', space=sflag, size = 0x4, scoped, tag = 'scoped memory for medal_forward.1']
  #allocation4 [shape = 's32[1]{0:T(128)S(6)}', space=smem, size = 0x200, scoped, tag = 'prefetched SMEM operand 0']
  %s0 = inlined_call_operand.<no memory space> [shape: s32[1], index: 0, kind: input, shape index: {}]
  %s1 = inlined_call_operand.vmem [shape: f32[8,16], index: 1, kind: input, shape index: {}]
  %s2 = inlined_call_operand.vmem [shape: f32[16,16], index: 2, kind: input, shape index: {}]
  %s3 = inlined_call_operand.vmem [shape: bf16[8,16], index: 3, kind: input, shape index: {}]
  %s4 = inlined_call_operand.vmem [shape: f32[128,128], index: 4, kind: input, shape index: {}]
  %s5 = inlined_call_operand.vmem [shape: f32[8,3], index: 5, kind: output, shape index: {}]
  %s6 = sld [smem:[#allocation0]]
  $region34: #{medal_forward.1} parent=0
    _
  %s8 = ssub.s32 1, %s6
  %s9 = scalar_select 0, %s8, %s6
  %10 = sst [smem:[#allocation4]] %s0
  // Predicated region
  $region2: #{medal_forward.1} parent=0 // pred_check
    _
  $region3: #{medal_forward.1} parent=0 // pred_check_branch
    %12 = sbr.rel (0) target = $region5
  $region4: #{medal_forward.1} parent=0 // pred_region
    _
  $region5: #{medal_forward.1} parent=0 // pred_fallthru
    _
  // Predicated region
  $region6: #{medal_forward.1} parent=0 // pred_check
    _
  $region7: #{medal_forward.1} parent=0 // pred_check_branch
    %14 = sbr.rel (0) target = $region9
  $region8: #{medal_forward.1} parent=0 // pred_region
    _
  $region9: #{medal_forward.1} parent=0 // pred_fallthru
    _
  // Predicated region
  $region10: #{medal_forward.1} parent=0 // pred_check
    _
  $region11: #{medal_forward.1} parent=0 // pred_check_branch
    %16 = sbr.rel (0) target = $region13
  $region12: #{medal_forward.1} parent=0 // pred_region
    _
  $region13: #{medal_forward.1} parent=0 // pred_fallthru
    _
  // Predicated region
  $region14: #{medal_forward.1} parent=0 // pred_check
    _
  $region15: #{medal_forward.1} parent=0 // pred_check_branch
    %18 = sbr.rel (0) target = $region17
  $region16: #{medal_forward.1} parent=0 // pred_region
    _
  $region17: #{medal_forward.1} parent=0 // pred_fallthru
    _
  %v19 = vld [vmem:[%s4] sm:$0xff]
  %v20 = vld [vmem:[%s4 + $0x8] sm:$0xff]
  %p21 = scmp.eq.s32.totalorder 0, 0
  // Predicated region
  $region18: #{medal_forward.1} parent=0 // pred_check
    %p22 = pneg %p21
  $region19: #{medal_forward.1} parent=0 // pred_check_branch
    %24 = sbr.rel (%p22) target = $region21
  $region20: #{medal_forward.1} parent=0 // pred_region
    %vm25 = vcmask 97280
    %26 = vst.msk [vmem:[#allocation2] sm:$0xff] %vm25, 0.0
  $region21: #{medal_forward.1} parent=0 // pred_fallthru
    _
  %v27 = vld [vmem:[%s2] sm:$0xff]
  %v28 = vld [vmem:[%s2 + $0x8] sm:$0xff]
  %vm29 = vcmask 130048
  %v31 = vsel %vm29, %v27, 0
  %v34 = vsel %vm29, %v28, 0
  %36 = vmatprep.subr.mxu0 0.0
  %37 = vmatpush1.msra.mxu0 %v19
  %38 = vmatprep.subr.mxu0 0.0
  %39 = vmatpush1.msra.mxu0 %v20
  %40 = vmatprep.subr.mxu0 0.0
  %41 = vmatpush1.msra.mxu0 0.0
  %42 = vmatprep.subr.mxu0 0.0
  %43 = vmatpush1.msra.mxu0 0.0
  %44 = vmatprep.subr.mxu0 0.0
  %45 = vmatpush1.msra.mxu0 0.0
  %46 = vmatprep.subr.mxu0 0.0
  %47 = vmatpush1.msra.mxu0 0.0
  %48 = vmatprep.subr.mxu0 0.0
  %49 = vmatpush1.msra.mxu0 0.0
  %50 = vmatprep.subr.mxu0 0.0
  %51 = vmatpush1.msra.mxu0 0.0
  %52 = vmatprep.subr.mxu0 0.0
  %53 = vmatpush1.msra.mxu0 0.0
  %54 = vmatprep.subr.mxu0 0.0
  %55 = vmatpush1.msra.mxu0 0.0
  %56 = vmatprep.subr.mxu0 0.0
  %57 = vmatpush1.msra.mxu0 0.0
  %58 = vmatprep.subr.mxu0 0.0
  %59 = vmatpush1.msra.mxu0 0.0
  %60 = vmatprep.subr.mxu0 0.0
  %61 = vmatpush1.msra.mxu0 0.0
  %62 = vmatprep.subr.mxu0 0.0
  %63 = vmatpush1.msra.mxu0 0.0
  %64 = vmatprep.subr.mxu0 0.0
  %65 = vmatpush1.msra.mxu0 0.0
  %66 = vmatprep.subr.mxu0 0.0
  %67 = vmatpush1.msra.mxu0 0.0
  %68 = vmatprep.subr.mxu0 0.0
  %69 = vmatpush1.msra.mxu0 0.0
  %70 = vmatprep.subr.mxu0 0.0
  %71 = vmatpush1.msra.mxu0 0.0
  %72 = vmatprep.subr.mxu0 0.0
  %73 = vmatpush1.msra.mxu0 0.0
  %74 = vmatprep.subr.mxu0 0.0
  %75 = vmatpush1.msra.mxu0 0.0
  %76 = vmatprep.subr.mxu0 0.0
  %77 = vmatpush1.msra.mxu0 0.0
  %78 = vmatprep.subr.mxu0 0.0
  %79 = vmatpush1.msra.mxu0 0.0
  %80 = vmatprep.subr.mxu0 0.0
  %81 = vmatpush1.msra.mxu0 0.0
  %82 = vmatprep.subr.mxu0 0.0
  %83 = vmatpush1.msra.mxu0 0.0
  %84 = vmatprep.subr.mxu0 0.0
  %85 = vmatpush1.msra.mxu0 0.0
  %86 = vmatprep.subr.mxu0 0.0
  %87 = vmatpush1.msra.mxu0 0.0
  %88 = vmatprep.subr.mxu0 0.0
  %89 = vmatpush1.msra.mxu0 0.0
  %90 = vmatprep.subr.mxu0 0.0
  %91 = vmatpush1.msra.mxu0 0.0
  %92 = vmatprep.subr.mxu0 0.0
  %93 = vmatpush1.msra.mxu0 0.0
  %94 = vmatprep.subr.mxu0 0.0
  %95 = vmatpush1.msra.mxu0 0.0
  %96 = vmatprep.subr.mxu0 0.0
  %97 = vmatpush1.msra.mxu0 0.0
  %98 = vmatprep.subr.mxu0 0.0
  %99 = vmatpush1.msra.mxu0 0.0
  %100 = vmatprep.mubr.f32.mxu0 0.0
  %101 = vmatmul.mubr.f32.gmra.mrb[0].mxu0 %v31
  %v102 = vpop.f32.mrb[0].mxu0
  %v103 = vadd.f32 0.0, %v102
  %v104 = vpop.f32.mrb[0].mxu0
  %105 = vmatprep.mubr.f32.mxu0 0.0
  %106 = vmatmul.mubr.f32.gmra.mrb[0].mxu0 %v34
  %v107 = vpop.f32.mrb[0].mxu0
  %v108 = vadd.f32 0.0, %v107
  %v109 = vpop.f32.mrb[0].mxu0
  %110 = vdwg.mxu0
  %v111 = vld [vmem:[#allocation2] sm:$0xff]
  %v112 = vld [vmem:[%s3] sm:$0xf]
  %v113 = vunpack.c.l.bf16 %v112
  %v115 = vsel %vm29, %v113, 0
  %117 = vmatprep.subr.mxu0 0.0
  %118 = vmatpush1.msra.mxu0 %v103
  %119 = vmatprep.subr.mxu0 0.0
  %120 = vmatpush1.msra.mxu0 %v108
  %121 = vmatprep.subr.mxu0 0.0
  %122 = vmatpush1.msra.mxu0 0.0
  %123 = vmatprep.subr.mxu0 0.0
  %124 = vmatpush1.msra.mxu0 0.0
  %125 = vmatprep.subr.mxu0 0.0
  %126 = vmatpush1.msra.mxu0 0.0
  %127 = vmatprep.subr.mxu0 0.0
  %128 = vmatpush1.msra.mxu0 0.0
  %129 = vmatprep.subr.mxu0 0.0
  %130 = vmatpush1.msra.mxu0 0.0
  %131 = vmatprep.subr.mxu0 0.0
  %132 = vmatpush1.msra.mxu0 0.0
  %133 = vmatprep.subr.mxu0 0.0
  %134 = vmatpush1.msra.mxu0 0.0
  %135 = vmatprep.subr.mxu0 0.0
  %136 = vmatpush1.msra.mxu0 0.0
  %137 = vmatprep.subr.mxu0 0.0
  %138 = vmatpush1.msra.mxu0 0.0
  %139 = vmatprep.subr.mxu0 0.0
  %140 = vmatpush1.msra.mxu0 0.0
  %141 = vmatprep.subr.mxu0 0.0
  %142 = vmatpush1.msra.mxu0 0.0
  %143 = vmatprep.subr.mxu0 0.0
  %144 = vmatpush1.msra.mxu0 0.0
  %145 = vmatprep.subr.mxu0 0.0
  %146 = vmatpush1.msra.mxu0 0.0
  %147 = vmatprep.subr.mxu0 0.0
  %148 = vmatpush1.msra.mxu0 0.0
  %149 = vmatprep.subr.mxu0 0.0
  %150 = vmatpush1.msra.mxu0 0.0
  %151 = vmatprep.subr.mxu0 0.0
  %152 = vmatpush1.msra.mxu0 0.0
  %153 = vmatprep.subr.mxu0 0.0
  %154 = vmatpush1.msra.mxu0 0.0
  %155 = vmatprep.subr.mxu0 0.0
  %156 = vmatpush1.msra.mxu0 0.0
  %157 = vmatprep.subr.mxu0 0.0
  %158 = vmatpush1.msra.mxu0 0.0
  %159 = vmatprep.subr.mxu0 0.0
  %160 = vmatpush1.msra.mxu0 0.0
  %161 = vmatprep.subr.mxu0 0.0
  %162 = vmatpush1.msra.mxu0 0.0
  %163 = vmatprep.subr.mxu0 0.0
  %164 = vmatpush1.msra.mxu0 0.0
  %165 = vmatprep.subr.mxu0 0.0
  %166 = vmatpush1.msra.mxu0 0.0
  %167 = vmatprep.subr.mxu0 0.0
  %168 = vmatpush1.msra.mxu0 0.0
  %169 = vmatprep.subr.mxu0 0.0
  %170 = vmatpush1.msra.mxu0 0.0
  %171 = vmatprep.subr.mxu0 0.0
  %172 = vmatpush1.msra.mxu0 0.0
  %173 = vmatprep.subr.mxu0 0.0
  %174 = vmatpush1.msra.mxu0 0.0
  %175 = vmatprep.subr.mxu0 0.0
  %176 = vmatpush1.msra.mxu0 0.0
  %177 = vmatprep.subr.mxu0 0.0
  %178 = vmatpush1.msra.mxu0 0.0
  %179 = vmatprep.subr.mxu0 0.0
  %180 = vmatpush1.msra.mxu0 0.0
  %181 = vmatprep.mubr.f32.mxu0 0.0
  %182 = vmatmul.mubr.f32.gmra.mrb[0].mxu0 %v115
  %v183 = vpop.f32.mrb[0].mxu0
  %v184 = vadd.f32 0.0, %v183
  %v185 = vpop.f32.mrb[0].mxu0
  %186 = vdwg.mxu0
  %v187 = vadd.f32 %v111, %v184
  %vm188 = vcmask 97280
  %189 = vst.msk [vmem:[#allocation2] sm:$0xff] %vm188, %v187
  // Predicated region
  $region22: #{medal_forward.1} parent=0 // pred_check
    %p190 = pneg %p21
  $region23: #{medal_forward.1} parent=0 // pred_check_branch
    %192 = sbr.rel (%p190) target = $region25
  $region24: #{medal_forward.1} parent=0 // pred_region
    %v193 = vld [vmem:[%s1] sm:$0xff]
    %v195 = vsel %vm29, %v193, 0
    %197 = vmatprep.subr.mxu0 0.0
    %198 = vmatpush1.msra.mxu0 %v19
    %199 = vmatprep.subr.mxu0 0.0
    %200 = vmatpush1.msra.mxu0 %v20
    %201 = vmatprep.subr.mxu0 0.0
    %202 = vmatpush1.msra.mxu0 0.0
    %203 = vmatprep.subr.mxu0 0.0
    %204 = vmatpush1.msra.mxu0 0.0
    %205 = vmatprep.subr.mxu0 0.0
    %206 = vmatpush1.msra.mxu0 0.0
    %207 = vmatprep.subr.mxu0 0.0
    %208 = vmatpush1.msra.mxu0 0.0
    %209 = vmatprep.subr.mxu0 0.0
    %210 = vmatpush1.msra.mxu0 0.0
    %211 = vmatprep.subr.mxu0 0.0
    %212 = vmatpush1.msra.mxu0 0.0
    %213 = vmatprep.subr.mxu0 0.0
    %214 = vmatpush1.msra.mxu0 0.0
    %215 = vmatprep.subr.mxu0 0.0
    %216 = vmatpush1.msra.mxu0 0.0
    %217 = vmatprep.subr.mxu0 0.0
    %218 = vmatpush1.msra.mxu0 0.0
    %219 = vmatprep.subr.mxu0 0.0
    %220 = vmatpush1.msra.mxu0 0.0
    %221 = vmatprep.subr.mxu0 0.0
    %222 = vmatpush1.msra.mxu0 0.0
    %223 = vmatprep.subr.mxu0 0.0
    %224 = vmatpush1.msra.mxu0 0.0
    %225 = vmatprep.subr.mxu0 0.0
    %226 = vmatpush1.msra.mxu0 0.0
    %227 = vmatprep.subr.mxu0 0.0
    %228 = vmatpush1.msra.mxu0 0.0
    %229 = vmatprep.subr.mxu0 0.0
    %230 = vmatpush1.msra.mxu0 0.0
    %231 = vmatprep.subr.mxu0 0.0
    %232 = vmatpush1.msra.mxu0 0.0
    %233 = vmatprep.subr.mxu0 0.0
    %234 = vmatpush1.msra.mxu0 0.0
    %235 = vmatprep.subr.mxu0 0.0
    %236 = vmatpush1.msra.mxu0 0.0
    %237 = vmatprep.subr.mxu0 0.0
    %238 = vmatpush1.msra.mxu0 0.0
    %239 = vmatprep.subr.mxu0 0.0
    %240 = vmatpush1.msra.mxu0 0.0
    %241 = vmatprep.subr.mxu0 0.0
    %242 = vmatpush1.msra.mxu0 0.0
    %243 = vmatprep.subr.mxu0 0.0
    %244 = vmatpush1.msra.mxu0 0.0
    %245 = vmatprep.subr.mxu0 0.0
    %246 = vmatpush1.msra.mxu0 0.0
    %247 = vmatprep.subr.mxu0 0.0
    %248 = vmatpush1.msra.mxu0 0.0
    %249 = vmatprep.subr.mxu0 0.0
    %250 = vmatpush1.msra.mxu0 0.0
    %251 = vmatprep.subr.mxu0 0.0
    %252 = vmatpush1.msra.mxu0 0.0
    %253 = vmatprep.subr.mxu0 0.0
    %254 = vmatpush1.msra.mxu0 0.0
    %255 = vmatprep.subr.mxu0 0.0
    %256 = vmatpush1.msra.mxu0 0.0
    %257 = vmatprep.subr.mxu0 0.0
    %258 = vmatpush1.msra.mxu0 0.0
    %259 = vmatprep.subr.mxu0 0.0
    %260 = vmatpush1.msra.mxu0 0.0
    %261 = vmatprep.mubr.f32.mxu0 0.0
    %262 = vmatmul.mubr.f32.gmra.mrb[0].mxu0 %v195
    %v263 = vpop.f32.mrb[0].mxu0
    %v264 = vadd.f32 0.0, %v263
    %v265 = vpop.f32.mrb[0].mxu0
    %266 = vdwg.mxu0
    %v267 = vlaneseq
    %v268 = vand.u32 %v267, 127
    %vm269 = vcmp.lt.s32.totalorder %v268, 6
    %v270 = vld [vmem:[#allocation2] sm:$0xff]
    %v271 = vsel %vm269, %v264, %v270
    %v272 = vld [vmem:[%s4 + $0x10] sm:$0xff]
    %v273 = vld [vmem:[%s4 + $0x18] sm:$0xf]
    %v274 = vld [vmem:[%s4 + $0x68] sm:$0x1]
    %s275 = sld [smem:[#allocation4]]
    %v276 = vlaneseq
    %v277 = vshrl.u32 %v276, 7
    %v278 = vsub.s32 0, %v277
    %v279 = vrot.slane %v274, %v278
    %v281 = vsel %vm188, %v271, 0
    %vm283 = vcmask 1043456
    %v285 = vsel %vm283, %v273, 0
    %287 = vmatprep.subr.mxu0 0.0
    %288 = vmatpush1.msra.mxu0 %v272
    %289 = vmatprep.subr.mxu0 0.0
    %290 = vmatpush1.msra.mxu0 %v285
    %291 = vmatprep.subr.mxu0 0.0
    %292 = vmatpush1.msra.mxu0 0.0
    %293 = vmatprep.subr.mxu0 0.0
    %294 = vmatpush1.msra.mxu0 0.0
    %295 = vmatprep.subr.mxu0 0.0
    %296 = vmatpush1.msra.mxu0 0.0
    %297 = vmatprep.subr.mxu0 0.0
    %298 = vmatpush1.msra.mxu0 0.0
    %299 = vmatprep.subr.mxu0 0.0
    %300 = vmatpush1.msra.mxu0 0.0
    %301 = vmatprep.subr.mxu0 0.0
    %302 = vmatpush1.msra.mxu0 0.0
    %303 = vmatprep.subr.mxu0 0.0
    %304 = vmatpush1.msra.mxu0 0.0
    %305 = vmatprep.subr.mxu0 0.0
    %306 = vmatpush1.msra.mxu0 0.0
    %307 = vmatprep.subr.mxu0 0.0
    %308 = vmatpush1.msra.mxu0 0.0
    %309 = vmatprep.subr.mxu0 0.0
    %310 = vmatpush1.msra.mxu0 0.0
    %311 = vmatprep.subr.mxu0 0.0
    %312 = vmatpush1.msra.mxu0 0.0
    %313 = vmatprep.subr.mxu0 0.0
    %314 = vmatpush1.msra.mxu0 0.0
    %315 = vmatprep.subr.mxu0 0.0
    %316 = vmatpush1.msra.mxu0 0.0
    %317 = vmatprep.subr.mxu0 0.0
    %318 = vmatpush1.msra.mxu0 0.0
    %319 = vmatprep.subr.mxu0 0.0
    %320 = vmatpush1.msra.mxu0 0.0
    %321 = vmatprep.subr.mxu0 0.0
    %322 = vmatpush1.msra.mxu0 0.0
    %323 = vmatprep.subr.mxu0 0.0
    %324 = vmatpush1.msra.mxu0 0.0
    %325 = vmatprep.subr.mxu0 0.0
    %326 = vmatpush1.msra.mxu0 0.0
    %327 = vmatprep.subr.mxu0 0.0
    %328 = vmatpush1.msra.mxu0 0.0
    %329 = vmatprep.subr.mxu0 0.0
    %330 = vmatpush1.msra.mxu0 0.0
    %331 = vmatprep.subr.mxu0 0.0
    %332 = vmatpush1.msra.mxu0 0.0
    %333 = vmatprep.subr.mxu0 0.0
    %334 = vmatpush1.msra.mxu0 0.0
    %335 = vmatprep.subr.mxu0 0.0
    %336 = vmatpush1.msra.mxu0 0.0
    %337 = vmatprep.subr.mxu0 0.0
    %338 = vmatpush1.msra.mxu0 0.0
    %339 = vmatprep.subr.mxu0 0.0
    %340 = vmatpush1.msra.mxu0 0.0
    %341 = vmatprep.subr.mxu0 0.0
    %342 = vmatpush1.msra.mxu0 0.0
    %343 = vmatprep.subr.mxu0 0.0
    %344 = vmatpush1.msra.mxu0 0.0
    %345 = vmatprep.subr.mxu0 0.0
    %346 = vmatpush1.msra.mxu0 0.0
    %347 = vmatprep.subr.mxu0 0.0
    %348 = vmatpush1.msra.mxu0 0.0
    %349 = vmatprep.subr.mxu0 0.0
    %350 = vmatpush1.msra.mxu0 0.0
    %351 = vmatprep.mubr.f32.mxu0 0.0
    %352 = vmatmul.mubr.f32.gmra.mrb[0].mxu0 %v281
    %v353 = vpop.f32.mrb[0].mxu0
    %v354 = vadd.f32 %v279, %v353
    %v355 = vpop.f32.mrb[0].mxu0
    %356 = vdwg.mxu0
    %v357 = vlaneseq
    %v358 = vshrl.u32 %v357, 7
    %v359 = vstv %s275
    %vm360 = vcmp.eq.s32.totalorder %v358, %v359
    %p361 = scmp.ne.s32.totalorder %s275, 0
    %s362 = scalar_select %p361, 1, 0
    %v363 = vstv %s362
    %vm364 = vcmp.eq.s32.totalorder %v363, 1
    %vm365 = vmand %vm360, %vm364
    %v366 = vsel %vm365, %v354, %v271
    %vm367 = vcmp.gt.f32.partialorder %v366, 0.0
    %v368 = vmul.f32 %v366, 0.1
    %v369 = vsel %vm367, %v366, %v368
    %v370 = vld [vmem:[%s4 + $0x20] sm:$0xff]
    %v371 = vld [vmem:[%s4 + $0x28] sm:$0xf]
    %v372 = vld [vmem:[%s4 + $0x69] sm:$0x1]
    %v373 = vlaneseq
    %v374 = vshrl.u32 %v373, 7
    %v375 = vsub.s32 0, %v374
    %v376 = vrot.slane %v372, %v375
    %v378 = vsel %vm188, %v369, 0
    %v381 = vsel %vm283, %v371, 0
    %383 = vmatprep.subr.mxu0 0.0
    %384 = vmatpush1.msra.mxu0 %v370
    %385 = vmatprep.subr.mxu0 0.0
    %386 = vmatpush1.msra.mxu0 %v381
    %387 = vmatprep.subr.mxu0 0.0
    %388 = vmatpush1.msra.mxu0 0.0
    %389 = vmatprep.subr.mxu0 0.0
    %390 = vmatpush1.msra.mxu0 0.0
    %391 = vmatprep.subr.mxu0 0.0
    %392 = vmatpush1.msra.mxu0 0.0
    %393 = vmatprep.subr.mxu0 0.0
    %394 = vmatpush1.msra.mxu0 0.0
    %395 = vmatprep.subr.mxu0 0.0
    %396 = vmatpush1.msra.mxu0 0.0
    %397 = vmatprep.subr.mxu0 0.0
    %398 = vmatpush1.msra.mxu0 0.0
    %399 = vmatprep.subr.mxu0 0.0
    %400 = vmatpush1.msra.mxu0 0.0
    %401 = vmatprep.subr.mxu0 0.0
    %402 = vmatpush1.msra.mxu0 0.0
    %403 = vmatprep.subr.mxu0 0.0
    %404 = vmatpush1.msra.mxu0 0.0
    %405 = vmatprep.subr.mxu0 0.0
    %406 = vmatpush1.msra.mxu0 0.0
    %407 = vmatprep.subr.mxu0 0.0
    %408 = vmatpush1.msra.mxu0 0.0
    %409 = vmatprep.subr.mxu0 0.0
    %410 = vmatpush1.msra.mxu0 0.0
    %411 = vmatprep.subr.mxu0 0.0
    %412 = vmatpush1.msra.mxu0 0.0
    %413 = vmatprep.subr.mxu0 0.0
    %414 = vmatpush1.msra.mxu0 0.0
    %415 = vmatprep.subr.mxu0 0.0
    %416 = vmatpush1.msra.mxu0 0.0
    %417 = vmatprep.subr.mxu0 0.0
    %418 = vmatpush1.msra.mxu0 0.0
    %419 = vmatprep.subr.mxu0 0.0
    %420 = vmatpush1.msra.mxu0 0.0
    %421 = vmatprep.subr.mxu0 0.0
    %422 = vmatpush1.msra.mxu0 0.0
    %423 = vmatprep.subr.mxu0 0.0
    %424 = vmatpush1.msra.mxu0 0.0
    %425 = vmatprep.subr.mxu0 0.0
    %426 = vmatpush1.msra.mxu0 0.0
    %427 = vmatprep.subr.mxu0 0.0
    %428 = vmatpush1.msra.mxu0 0.0
    %429 = vmatprep.subr.mxu0 0.0
    %430 = vmatpush1.msra.mxu0 0.0
    %431 = vmatprep.subr.mxu0 0.0
    %432 = vmatpush1.msra.mxu0 0.0
    %433 = vmatprep.subr.mxu0 0.0
    %434 = vmatpush1.msra.mxu0 0.0
    %435 = vmatprep.subr.mxu0 0.0
    %436 = vmatpush1.msra.mxu0 0.0
    %437 = vmatprep.subr.mxu0 0.0
    %438 = vmatpush1.msra.mxu0 0.0
    %439 = vmatprep.subr.mxu0 0.0
    %440 = vmatpush1.msra.mxu0 0.0
    %441 = vmatprep.subr.mxu0 0.0
    %442 = vmatpush1.msra.mxu0 0.0
    %443 = vmatprep.subr.mxu0 0.0
    %444 = vmatpush1.msra.mxu0 0.0
    %445 = vmatprep.subr.mxu0 0.0
    %446 = vmatpush1.msra.mxu0 0.0
    %447 = vmatprep.mubr.f32.mxu0 0.0
    %448 = vmatmul.mubr.f32.gmra.mrb[0].mxu0 %v378
    %v449 = vpop.f32.mrb[0].mxu0
    %v450 = vadd.f32 %v376, %v449
    %v451 = vpop.f32.mrb[0].mxu0
    %452 = vdwg.mxu0
    %454 = vrot.lane.b32.xlu0 %v450, 116
    %v455 = vpop.permute.xlu0 %454
    %v456 = vsel %vm188, %v450, 0
    %v458 = vsel %vm188, %v455, 0
    %460 = vmatprep.subr.mxu0 0.0
    %461 = vmatpush1.xpose.msra.mxu0 %v458
    %462 = vmatprep.subr.mxu0 0.0
    %463 = vmatpush1.xpose.msra.mxu0 0.0
    %464 = vmatprep.subr.mxu0 0.0
    %465 = vmatpush1.xpose.msra.mxu0 0.0
    %466 = vmatprep.subr.mxu0 0.0
    %467 = vmatpush1.xpose.msra.mxu0 0.0
    %468 = vmatprep.subr.mxu0 0.0
    %469 = vmatpush1.xpose.msra.mxu0 0.0
    %470 = vmatprep.subr.mxu0 0.0
    %471 = vmatpush1.xpose.msra.mxu0 0.0
    %472 = vmatprep.subr.mxu0 0.0
    %473 = vmatpush1.xpose.msra.mxu0 0.0
    %474 = vmatprep.subr.mxu0 0.0
    %475 = vmatpush1.xpose.msra.mxu0 0.0
    %476 = vmatprep.subr.mxu0 0.0
    %477 = vmatpush1.xpose.msra.mxu0 0.0
    %478 = vmatprep.subr.mxu0 0.0
    %479 = vmatpush1.xpose.msra.mxu0 0.0
    %480 = vmatprep.subr.mxu0 0.0
    %481 = vmatpush1.xpose.msra.mxu0 0.0
    %482 = vmatprep.subr.mxu0 0.0
    %483 = vmatpush1.xpose.msra.mxu0 0.0
    %484 = vmatprep.subr.mxu0 0.0
    %485 = vmatpush1.xpose.msra.mxu0 0.0
    %486 = vmatprep.subr.mxu0 0.0
    %487 = vmatpush1.xpose.msra.mxu0 0.0
    %488 = vmatprep.subr.mxu0 0.0
    %489 = vmatpush1.xpose.msra.mxu0 0.0
    %490 = vmatprep.subr.mxu0 0.0
    %491 = vmatpush1.xpose.msra.mxu0 0.0
    %492 = vmatprep.subr.mxu0 0.0
    %493 = vmatpush1.xpose.msra.mxu0 0.0
    %494 = vmatprep.subr.mxu0 0.0
    %495 = vmatpush1.xpose.msra.mxu0 0.0
    %496 = vmatprep.subr.mxu0 0.0
    %497 = vmatpush1.xpose.msra.mxu0 0.0
    %498 = vmatprep.subr.mxu0 0.0
    %499 = vmatpush1.xpose.msra.mxu0 0.0
    %500 = vmatprep.subr.mxu0 0.0
    %501 = vmatpush1.xpose.msra.mxu0 0.0
    %502 = vmatprep.subr.mxu0 0.0
    %503 = vmatpush1.xpose.msra.mxu0 0.0
    %504 = vmatprep.subr.mxu0 0.0
    %505 = vmatpush1.xpose.msra.mxu0 0.0
    %506 = vmatprep.subr.mxu0 0.0
    %507 = vmatpush1.xpose.msra.mxu0 0.0
    %508 = vmatprep.subr.mxu0 0.0
    %509 = vmatpush1.xpose.msra.mxu0 0.0
    %510 = vmatprep.subr.mxu0 0.0
    %511 = vmatpush1.xpose.msra.mxu0 0.0
    %512 = vmatprep.subr.mxu0 0.0
    %513 = vmatpush1.xpose.msra.mxu0 0.0
    %514 = vmatprep.subr.mxu0 0.0
    %515 = vmatpush1.xpose.msra.mxu0 0.0
    %516 = vmatprep.subr.mxu0 0.0
    %517 = vmatpush1.xpose.msra.mxu0 0.0
    %518 = vmatprep.subr.mxu0 0.0
    %519 = vmatpush1.xpose.msra.mxu0 0.0
    %520 = vmatprep.subr.mxu0 0.0
    %521 = vmatpush1.xpose.msra.mxu0 0.0
    %522 = vmatprep.subr.mxu0 0.0
    %523 = vmatpush1.xpose.msra.mxu0 0.0
    %524 = vmatprep.mubr.f32.mxu0 0.0
    %525 = vmatmul.mubr.f32.gmra.mrb[0].mxu0 %v456
    %v526 = vpop.f32.mrb[0].mxu0
    %v527 = vadd.f32 0.0, %v526
    %v528 = vpop.f32.mrb[0].mxu0
    %529 = vdwg.mxu0
    %vm530 = vcmask 64512
    %v531 = vsel %vm530, %v527, -inf
    %532 = vmax.xlane.f32.xlu0 %v531
    %v533 = vpop.xlane.xlu0 %532
    %v534 = vsub.f32 %v527, %v533
    %v535 = vmul.f32 %v534, 1.442695
    %v536 = vpow.pop %v535
    %v537 = vsel %vm530, %v536, 0.0
    %538 = vadd.xlane.f32.xlu0 %v537
    %v539 = vpop.xlane.xlu0 %538
    %v540 = vrcp.pop %v539
    %v541 = vmul.f32 %v539, %v540
    %v542 = vsub.f32 2.0, %v541
    %v543 = vmul.f32 %v540, %v542
    %v544 = vmul.f32 %v536, %v543
    %545 = vrot.lane.b32.xlu0 %v450, 104
    %v546 = vpop.permute.xlu0 %545
    %v549 = vsel %vm530, %v544, 0
    %551 = vmatprep.subr.mxu0 0.0
    %552 = vmatpush1.msra.mxu0 %v546
    %553 = vmatprep.subr.mxu0 0.0
    %554 = vmatpush1.msra.mxu0 0.0
    %555 = vmatprep.subr.mxu0 0.0
    %556 = vmatpush1.msra.mxu0 0.0
    %557 = vmatprep.subr.mxu0 0.0
    %558 = vmatpush1.msra.mxu0 0.0
    %559 = vmatprep.subr.mxu0 0.0
    %560 = vmatpush1.msra.mxu0 0.0
    %561 = vmatprep.subr.mxu0 0.0
    %562 = vmatpush1.msra.mxu0 0.0
    %563 = vmatprep.subr.mxu0 0.0
    %564 = vmatpush1.msra.mxu0 0.0
    %565 = vmatprep.subr.mxu0 0.0
    %566 = vmatpush1.msra.mxu0 0.0
    %567 = vmatprep.subr.mxu0 0.0
    %568 = vmatpush1.msra.mxu0 0.0
    %569 = vmatprep.subr.mxu0 0.0
    %570 = vmatpush1.msra.mxu0 0.0
    %571 = vmatprep.subr.mxu0 0.0
    %572 = vmatpush1.msra.mxu0 0.0
    %573 = vmatprep.subr.mxu0 0.0
    %574 = vmatpush1.msra.mxu0 0.0
    %575 = vmatprep.subr.mxu0 0.0
    %576 = vmatpush1.msra.mxu0 0.0
    %577 = vmatprep.subr.mxu0 0.0
    %578 = vmatpush1.msra.mxu0 0.0
    %579 = vmatprep.subr.mxu0 0.0
    %580 = vmatpush1.msra.mxu0 0.0
    %581 = vmatprep.subr.mxu0 0.0
    %582 = vmatpush1.msra.mxu0 0.0
    %583 = vmatprep.subr.mxu0 0.0
    %584 = vmatpush1.msra.mxu0 0.0
    %585 = vmatprep.subr.mxu0 0.0
    %586 = vmatpush1.msra.mxu0 0.0
    %587 = vmatprep.subr.mxu0 0.0
    %588 = vmatpush1.msra.mxu0 0.0
    %589 = vmatprep.subr.mxu0 0.0
    %590 = vmatpush1.msra.mxu0 0.0
    %591 = vmatprep.subr.mxu0 0.0
    %592 = vmatpush1.msra.mxu0 0.0
    %593 = vmatprep.subr.mxu0 0.0
    %594 = vmatpush1.msra.mxu0 0.0
    %595 = vmatprep.subr.mxu0 0.0
    %596 = vmatpush1.msra.mxu0 0.0
    %597 = vmatprep.subr.mxu0 0.0
    %598 = vmatpush1.msra.mxu0 0.0
    %599 = vmatprep.subr.mxu0 0.0
    %600 = vmatpush1.msra.mxu0 0.0
    %601 = vmatprep.subr.mxu0 0.0
    %602 = vmatpush1.msra.mxu0 0.0
    %603 = vmatprep.subr.mxu0 0.0
    %604 = vmatpush1.msra.mxu0 0.0
    %605 = vmatprep.subr.mxu0 0.0
    %606 = vmatpush1.msra.mxu0 0.0
    %607 = vmatprep.subr.mxu0 0.0
    %608 = vmatpush1.msra.mxu0 0.0
    %609 = vmatprep.subr.mxu0 0.0
    %610 = vmatpush1.msra.mxu0 0.0
    %611 = vmatprep.subr.mxu0 0.0
    %612 = vmatpush1.msra.mxu0 0.0
    %613 = vmatprep.subr.mxu0 0.0
    %614 = vmatpush1.msra.mxu0 0.0
    %615 = vmatprep.mubr.f32.mxu0 0.0
    %616 = vmatmul.mubr.f32.gmra.mrb[0].mxu0 %v549
    %v617 = vpop.f32.mrb[0].mxu0
    %v618 = vadd.f32 %v369, %v617
    %v619 = vpop.f32.mrb[0].mxu0
    %620 = vdwg.mxu0
    %v621 = vld [vmem:[%s4 + $0x30] sm:$0xff]
    %v622 = vld [vmem:[%s4 + $0x38] sm:$0xf]
    %v623 = vld [vmem:[%s4 + $0x6a] sm:$0x1]
    %v624 = vld [vmem:[%s4 + $0x40] sm:$0xff]
    %v625 = vld [vmem:[%s4 + $0x48] sm:$0xff]
    %v626 = vld [vmem:[%s4 + $0x50] sm:$0xff]
    %v627 = vld [vmem:[%s4 + $0x6b] sm:$0x1]
    %v628 = vlaneseq
    %v629 = vshrl.u32 %v628, 7
    %v630 = vsub.s32 0, %v629
    %v631 = vrot.slane %v623, %v630
    %v633 = vsel %vm188, %v618, 0
    %v636 = vsel %vm283, %v622, 0
    %638 = vmatprep.subr.mxu0 0.0
    %639 = vmatpush1.msra.mxu0 %v621
    %640 = vmatprep.subr.mxu0 0.0
    %641 = vmatpush1.msra.mxu0 %v636
    %642 = vmatprep.subr.mxu0 0.0
    %643 = vmatpush1.msra.mxu0 0.0
    %644 = vmatprep.subr.mxu0 0.0
    %645 = vmatpush1.msra.mxu0 0.0
    %646 = vmatprep.subr.mxu0 0.0
    %647 = vmatpush1.msra.mxu0 0.0
    %648 = vmatprep.subr.mxu0 0.0
    %649 = vmatpush1.msra.mxu0 0.0
    %650 = vmatprep.subr.mxu0 0.0
    %651 = vmatpush1.msra.mxu0 0.0
    %652 = vmatprep.subr.mxu0 0.0
    %653 = vmatpush1.msra.mxu0 0.0
    %654 = vmatprep.subr.mxu0 0.0
    %655 = vmatpush1.msra.mxu0 0.0
    %656 = vmatprep.subr.mxu0 0.0
    %657 = vmatpush1.msra.mxu0 0.0
    %658 = vmatprep.subr.mxu0 0.0
    %659 = vmatpush1.msra.mxu0 0.0
    %660 = vmatprep.subr.mxu0 0.0
    %661 = vmatpush1.msra.mxu0 0.0
    %662 = vmatprep.subr.mxu0 0.0
    %663 = vmatpush1.msra.mxu0 0.0
    %664 = vmatprep.subr.mxu0 0.0
    %665 = vmatpush1.msra.mxu0 0.0
    %666 = vmatprep.subr.mxu0 0.0
    %667 = vmatpush1.msra.mxu0 0.0
    %668 = vmatprep.subr.mxu0 0.0
    %669 = vmatpush1.msra.mxu0 0.0
    %670 = vmatprep.subr.mxu0 0.0
    %671 = vmatpush1.msra.mxu0 0.0
    %672 = vmatprep.subr.mxu0 0.0
    %673 = vmatpush1.msra.mxu0 0.0
    %674 = vmatprep.subr.mxu0 0.0
    %675 = vmatpush1.msra.mxu0 0.0
    %676 = vmatprep.subr.mxu0 0.0
    %677 = vmatpush1.msra.mxu0 0.0
    %678 = vmatprep.subr.mxu0 0.0
    %679 = vmatpush1.msra.mxu0 0.0
    %680 = vmatprep.subr.mxu0 0.0
    %681 = vmatpush1.msra.mxu0 0.0
    %682 = vmatprep.subr.mxu0 0.0
    %683 = vmatpush1.msra.mxu0 0.0
    %684 = vmatprep.subr.mxu0 0.0
    %685 = vmatpush1.msra.mxu0 0.0
    %686 = vmatprep.subr.mxu0 0.0
    %687 = vmatpush1.msra.mxu0 0.0
    %688 = vmatprep.subr.mxu0 0.0
    %689 = vmatpush1.msra.mxu0 0.0
    %690 = vmatprep.subr.mxu0 0.0
    %691 = vmatpush1.msra.mxu0 0.0
    %692 = vmatprep.subr.mxu0 0.0
    %693 = vmatpush1.msra.mxu0 0.0
    %694 = vmatprep.subr.mxu0 0.0
    %695 = vmatpush1.msra.mxu0 0.0
    %696 = vmatprep.subr.mxu0 0.0
    %697 = vmatpush1.msra.mxu0 0.0
    %698 = vmatprep.subr.mxu0 0.0
    %699 = vmatpush1.msra.mxu0 0.0
    %700 = vmatprep.subr.mxu0 0.0
    %701 = vmatpush1.msra.mxu0 0.0
    %702 = vmatprep.mubr.f32.mxu0 0.0
    %703 = vmatmul.mubr.f32.gmra.mrb[0].mxu0 %v633
    %v704 = vpop.f32.mrb[0].mxu0
    %v705 = vadd.f32 %v631, %v704
    %v706 = vpop.f32.mrb[0].mxu0
    %707 = vdwg.mxu0
    %v708 = vmax.f32 %v705, 0.0
    %v709 = vlaneseq
    %v710 = vshrl.u32 %v709, 7
    %v711 = vsub.s32 0, %v710
    %v712 = vrot.slane %v627, %v711
    %vm713 = vcmask 195584
    %v715 = vsel %vm713, %v708, 0
    %717 = vmatprep.subr.mxu0 0.0
    %718 = vmatpush1.msra.mxu0 %v624
    %719 = vmatprep.subr.mxu0 0.0
    %720 = vmatpush1.msra.mxu0 %v625
    %721 = vmatprep.subr.mxu0 0.0
    %722 = vmatpush1.msra.mxu0 %v626
    %723 = vmatprep.subr.mxu0 0.0
    %724 = vmatpush1.msra.mxu0 0.0
    %725 = vmatprep.subr.mxu0 0.0
    %726 = vmatpush1.msra.mxu0 0.0
    %727 = vmatprep.subr.mxu0 0.0
    %728 = vmatpush1.msra.mxu0 0.0
    %729 = vmatprep.subr.mxu0 0.0
    %730 = vmatpush1.msra.mxu0 0.0
    %731 = vmatprep.subr.mxu0 0.0
    %732 = vmatpush1.msra.mxu0 0.0
    %733 = vmatprep.subr.mxu0 0.0
    %734 = vmatpush1.msra.mxu0 0.0
    %735 = vmatprep.subr.mxu0 0.0
    %736 = vmatpush1.msra.mxu0 0.0
    %737 = vmatprep.subr.mxu0 0.0
    %738 = vmatpush1.msra.mxu0 0.0
    %739 = vmatprep.subr.mxu0 0.0
    %740 = vmatpush1.msra.mxu0 0.0
    %741 = vmatprep.subr.mxu0 0.0
    %742 = vmatpush1.msra.mxu0 0.0
    %743 = vmatprep.subr.mxu0 0.0
    %744 = vmatpush1.msra.mxu0 0.0
    %745 = vmatprep.subr.mxu0 0.0
    %746 = vmatpush1.msra.mxu0 0.0
    %747 = vmatprep.subr.mxu0 0.0
    %748 = vmatpush1.msra.mxu0 0.0
    %749 = vmatprep.subr.mxu0 0.0
    %750 = vmatpush1.msra.mxu0 0.0
    %751 = vmatprep.subr.mxu0 0.0
    %752 = vmatpush1.msra.mxu0 0.0
    %753 = vmatprep.subr.mxu0 0.0
    %754 = vmatpush1.msra.mxu0 0.0
    %755 = vmatprep.subr.mxu0 0.0
    %756 = vmatpush1.msra.mxu0 0.0
    %757 = vmatprep.subr.mxu0 0.0
    %758 = vmatpush1.msra.mxu0 0.0
    %759 = vmatprep.subr.mxu0 0.0
    %760 = vmatpush1.msra.mxu0 0.0
    %761 = vmatprep.subr.mxu0 0.0
    %762 = vmatpush1.msra.mxu0 0.0
    %763 = vmatprep.subr.mxu0 0.0
    %764 = vmatpush1.msra.mxu0 0.0
    %765 = vmatprep.subr.mxu0 0.0
    %766 = vmatpush1.msra.mxu0 0.0
    %767 = vmatprep.subr.mxu0 0.0
    %768 = vmatpush1.msra.mxu0 0.0
    %769 = vmatprep.subr.mxu0 0.0
    %770 = vmatpush1.msra.mxu0 0.0
    %771 = vmatprep.subr.mxu0 0.0
    %772 = vmatpush1.msra.mxu0 0.0
    %773 = vmatprep.subr.mxu0 0.0
    %774 = vmatpush1.msra.mxu0 0.0
    %775 = vmatprep.subr.mxu0 0.0
    %776 = vmatpush1.msra.mxu0 0.0
    %777 = vmatprep.subr.mxu0 0.0
    %778 = vmatpush1.msra.mxu0 0.0
    %779 = vmatprep.subr.mxu0 0.0
    %780 = vmatpush1.msra.mxu0 0.0
    %781 = vmatprep.mubr.f32.mxu0 0.0
    %782 = vmatmul.mubr.f32.gmra.mrb[0].mxu0 %v715
    %v783 = vpop.f32.mrb[0].mxu0
    %v784 = vadd.f32 %v712, %v783
    %v785 = vpop.f32.mrb[0].mxu0
    %786 = vdwg.mxu0
    %v787 = vadd.f32 %v784, %v618
    %v788 = vld [vmem:[%s4 + $0x58] sm:$0xff]
    %v789 = vld [vmem:[%s4 + $0x60] sm:$0xf]
    %v790 = vld [vmem:[%s4 + $0x6c] sm:$0x1]
    %v791 = vlaneseq
    %v792 = vshrl.u32 %v791, 7
    %v793 = vsub.s32 0, %v792
    %v794 = vrot.slane %v790, %v793
    %v796 = vsel %vm188, %v787, 0
    %v799 = vsel %vm283, %v789, 0
    %801 = vmatprep.subr.mxu0 0.0
    %802 = vmatpush1.msra.mxu0 %v788
    %803 = vmatprep.subr.mxu0 0.0
    %804 = vmatpush1.msra.mxu0 %v799
    %805 = vmatprep.subr.mxu0 0.0
    %806 = vmatpush1.msra.mxu0 0.0
    %807 = vmatprep.subr.mxu0 0.0
    %808 = vmatpush1.msra.mxu0 0.0
    %809 = vmatprep.subr.mxu0 0.0
    %810 = vmatpush1.msra.mxu0 0.0
    %811 = vmatprep.subr.mxu0 0.0
    %812 = vmatpush1.msra.mxu0 0.0
    %813 = vmatprep.subr.mxu0 0.0
    %814 = vmatpush1.msra.mxu0 0.0
    %815 = vmatprep.subr.mxu0 0.0
    %816 = vmatpush1.msra.mxu0 0.0
    %817 = vmatprep.subr.mxu0 0.0
    %818 = vmatpush1.msra.mxu0 0.0
    %819 = vmatprep.subr.mxu0 0.0
    %820 = vmatpush1.msra.mxu0 0.0
    %821 = vmatprep.subr.mxu0 0.0
    %822 = vmatpush1.msra.mxu0 0.0
    %823 = vmatprep.subr.mxu0 0.0
    %824 = vmatpush1.msra.mxu0 0.0
    %825 = vmatprep.subr.mxu0 0.0
    %826 = vmatpush1.msra.mxu0 0.0
    %827 = vmatprep.subr.mxu0 0.0
    %828 = vmatpush1.msra.mxu0 0.0
    %829 = vmatprep.subr.mxu0 0.0
    %830 = vmatpush1.msra.mxu0 0.0
    %831 = vmatprep.subr.mxu0 0.0
    %832 = vmatpush1.msra.mxu0 0.0
    %833 = vmatprep.subr.mxu0 0.0
    %834 = vmatpush1.msra.mxu0 0.0
    %835 = vmatprep.subr.mxu0 0.0
    %836 = vmatpush1.msra.mxu0 0.0
    %837 = vmatprep.subr.mxu0 0.0
    %838 = vmatpush1.msra.mxu0 0.0
    %839 = vmatprep.subr.mxu0 0.0
    %840 = vmatpush1.msra.mxu0 0.0
    %841 = vmatprep.subr.mxu0 0.0
    %842 = vmatpush1.msra.mxu0 0.0
    %843 = vmatprep.subr.mxu0 0.0
    %844 = vmatpush1.msra.mxu0 0.0
    %845 = vmatprep.subr.mxu0 0.0
    %846 = vmatpush1.msra.mxu0 0.0
    %847 = vmatprep.subr.mxu0 0.0
    %848 = vmatpush1.msra.mxu0 0.0
    %849 = vmatprep.subr.mxu0 0.0
    %850 = vmatpush1.msra.mxu0 0.0
    %851 = vmatprep.subr.mxu0 0.0
    %852 = vmatpush1.msra.mxu0 0.0
    %853 = vmatprep.subr.mxu0 0.0
    %854 = vmatpush1.msra.mxu0 0.0
    %855 = vmatprep.subr.mxu0 0.0
    %856 = vmatpush1.msra.mxu0 0.0
    %857 = vmatprep.subr.mxu0 0.0
    %858 = vmatpush1.msra.mxu0 0.0
    %859 = vmatprep.subr.mxu0 0.0
    %860 = vmatpush1.msra.mxu0 0.0
    %861 = vmatprep.subr.mxu0 0.0
    %862 = vmatpush1.msra.mxu0 0.0
    %863 = vmatprep.subr.mxu0 0.0
    %864 = vmatpush1.msra.mxu0 0.0
    %865 = vmatprep.mubr.f32.mxu0 0.0
    %866 = vmatmul.mubr.f32.gmra.mrb[0].mxu0 %v796
    %v867 = vpop.f32.mrb[0].mxu0
    %v868 = vadd.f32 %v794, %v867
    %v869 = vpop.f32.mrb[0].mxu0
    %870 = vdwg.mxu0
    %vm871 = vcmask 23552
    %872 = vst.msk [vmem:[%s5] sm:$0xff] %vm871, %v868
  $region25: #{medal_forward.1} parent=0 // pred_fallthru
    _
  // Predicated region
  $region26: #{medal_forward.1} parent=0 // pred_check
    _
  $region27: #{medal_forward.1} parent=0 // pred_check_branch
    %874 = sbr.rel (0) target = $region29
  $region28: #{medal_forward.1} parent=0 // pred_region
    _
  $region29: #{medal_forward.1} parent=0 // pred_fallthru
    _
  // Predicated region
  $region30: #{medal_forward.1} parent=0 // pred_check
    _
  $region31: #{medal_forward.1} parent=0 // pred_check_branch
    %876 = sbr.rel (0) target = $region33
  $region32: #{medal_forward.1} parent=0 // pred_region
    _
  $region33: #{medal_forward.1} parent=0 // pred_fallthru
    _

</llo_original>
